<compile_context>
chip_gen: v5e
topology: v5e:2x2
jax: 0.10.0
libtpu: 0.0.40
codegen_flags: <defaults>
</compile_context>

<pallas_src>
import jax
import jax.numpy as jnp
from jax.experimental import pallas as pl
from jax.experimental.pallas import tpu as pltpu


def _make_gln_kernel(eps):
    def kernel(x_ref, g_ref, b_ref, o_ref):
        # x_ref: (D, TILE_N)   g_ref/b_ref: (D, 1)
        x = x_ref[...].astype(jnp.float32)
        inv_d = 1.0 / x.shape[0]
        mean = jnp.sum(x, axis=0, keepdims=True) * inv_d          # (1, TILE_N)
        xc = x - mean                                             # reused below
        var = jnp.sum(xc * xc, axis=0, keepdims=True) * inv_d     # unbiased=False
        # One reciprocal per column (exact, keeps parity with the reference),
        # then a broadcast multiply instead of a (D, TILE_N)-wide divide.
        inv_std = pl.reciprocal(jnp.sqrt(var) + eps, approx=False)
        gamma = g_ref[...].astype(jnp.float32)                    # (D, 1)
        beta = b_ref[...].astype(jnp.float32)                     # (D, 1)
        o_ref[...] = ((xc * inv_std) * gamma + beta).astype(o_ref.dtype)
    return kernel


def _choose_tile_n(n, d, itemsize, max_tile=None):
    """Pick a lane tile: multiple of 128 (or full N), sized for ~8 MiB of VMEM
    (2 double-buffered tiles x (in + out)) so it fits v7x's smaller VMEM."""
    budget = 8 << 20
    fit = budget // max(1, 4 * d * itemsize)
    cap = max(128, (fit // 128) * 128)
    cap = min(cap, 2048)
    if max_tile is not None:
        cap = min(cap, max_tile)
    if n <= cap:
        return n                      # full N as a single block (always legal)
    for t in range(cap, 127, -128):
        if n % t == 0:
            return t                  # exact 128-multiple divisor
    # TODO(synk): ragged N (no 128-multiple divisor <= cap) relies on Pallas
    # edge-block masking; reduction is over D so padded lanes never pollute
    # valid columns.
    return cap


def group_layer_norm(x, g, b, groups=1, eps=1e-5, max_tile_n=None):
    """x: (B, G*D, N); g, b: (1, G, D, 1). Returns (B, G*D, N)."""
    B, C, N = x.shape
    assert C % groups == 0
    D = C // groups
    x4 = x.reshape(B, groups, D, N)

    tile_n = _choose_tile_n(N, D, x.dtype.itemsize, max_tile_n)
    grid = (groups, B, pl.cdiv(N, tile_n))

    kernel = _make_gln_kernel(eps)

    out4 = pl.pallas_call(
        kernel,
        out_shape=jax.ShapeDtypeStruct((B, groups, D, N), x.dtype),
        grid=grid,
        in_specs=[
            pl.BlockSpec((pl.Squeezed(), pl.Squeezed(), D, tile_n),
                         lambda gi, bi, ni: (bi, gi, 0, ni)),
            # gamma/beta: block index depends only on the outermost grid axis
            # -> Pallas keeps them resident across the inner (B, N) loops.
            pl.BlockSpec((pl.Squeezed(), pl.Squeezed(), D, 1),
                         lambda gi, bi, ni: (0, gi, 0, 0)),
            pl.BlockSpec((pl.Squeezed(), pl.Squeezed(), D, 1),
                         lambda gi, bi, ni: (0, gi, 0, 0)),
        ],
        out_specs=pl.BlockSpec((pl.Squeezed(), pl.Squeezed(), D, tile_n),
                               lambda gi, bi, ni: (bi, gi, 0, ni)),
        compiler_params=pltpu.CompilerParams(
            dimension_semantics=("parallel", "parallel", "parallel")),
    )(x4, g, b)

    return out4.reshape(B, C, N)


def _reference(x, g, b, groups, eps):
    B, C, N = x.shape
    D = C // groups
    x4 = x.reshape(B, groups, D, N).astype(jnp.float32)
    mean = jnp.mean(x4, axis=2, keepdims=True)
    var = jnp.var(x4, axis=2, keepdims=True)  # ddof=0 == unbiased=False
    std = jnp.sqrt(var)
    out = (x4 - mean) / (std + eps) * g + b
    return out.reshape(B, C, N).astype(x.dtype)


def _run_case(key, B, groups, D, N, eps=1e-5, max_tile_n=None):
    kx, kg, kb = jax.random.split(key, 3)
    x = jax.random.normal(kx, (B, groups * D, N), dtype=jnp.float32)
    # Parameters as in nn.Module __init__ (ones / zeros), perturbed
    # deterministically so the scale/bias paths are actually exercised.
    g_param = jnp.ones((1, groups, D, 1), jnp.float32) \
        + 0.1 * jax.random.normal(kg, (1, groups, D, 1), dtype=jnp.float32)
    b_param = jnp.zeros((1, groups, D, 1), jnp.float32) \
        + 0.1 * jax.random.normal(kb, (1, groups, D, 1), dtype=jnp.float32)

    out = group_layer_norm(x, g_param, b_param, groups=groups, eps=eps,
                           max_tile_n=max_tile_n)
    out = jax.block_until_ready(out)

    ref = _reference(x, g_param, b_param, groups, eps)
    assert out.shape == (B, groups * D, N)
    assert jnp.allclose(out, ref, atol=1e-5, rtol=1e-5), \
        f"max err {jnp.max(jnp.abs(out - ref))}"


if __name__ == "__main__":
    key = jax.random.PRNGKey(0)
    k1, k2 = jax.random.split(key)

    # Small shape consistent with the module: B=2, C=G*D=32, N=8.
    _run_case(k1, B=2, groups=2, D=16, N=8)
    # Second small case exercising the N-tiling path (tile_n=128, 2 N-tiles)
    # with a lane-dense output block.
    _run_case(k2, B=2, groups=2, D=16, N=256, max_tile_n=128)

    print("KERNEL_OK")
</pallas_src>

<mosaic_0001>
module attributes {stable_mosaic.version = 11 : i64} {
  func.func @kernel(%arg0: i32, %arg1: i32, %arg2: i32, %arg3: memref<1x1x16x8xf32, #tpu.memory_space<vmem>>, %arg4: memref<1x1x16x1xf32, #tpu.memory_space<vmem>>, %arg5: memref<1x1x16x1xf32, #tpu.memory_space<vmem>>, %arg6: memref<1x1x16x8xf32, #tpu.memory_space<vmem>>) attributes {dimension_semantics = [#tpu.dimension_semantics<parallel>, #tpu.dimension_semantics<parallel>, #tpu.dimension_semantics<parallel>], iteration_bounds = array<i64: 2, 2, 1>, scalar_prefetch = 0 : i64, scratch_operands = 0 : i64, tpu.core_type = #tpu.core_type<tc>, window_params = [{transform_indices = @transform_0, window_bounds = array<i64: 1, 1, 16, 8>}, {transform_indices = @transform_1, window_bounds = array<i64: 1, 1, 16, 1>}, {transform_indices = @transform_2, window_bounds = array<i64: 1, 1, 16, 1>}, {transform_indices = @transform_3, window_bounds = array<i64: 1, 1, 16, 8>}]} {
    %c0 = arith.constant 0 : index
    %c0_0 = arith.constant 0 : index
    %c0_1 = arith.constant 0 : index
    %c0_2 = arith.constant 0 : index
    %0 = vector.load %arg3[%c0, %c0_0, %c0_1, %c0_2] : memref<1x1x16x8xf32, #tpu.memory_space<vmem>>, vector<1x1x16x8xf32>
    %1 = vector.shape_cast %0 : vector<1x1x16x8xf32> to vector<16x8xf32>
    %cst = arith.constant dense<0.000000e+00> : vector<8xf32>
    %2 = vector.multi_reduction <add>, %1, %cst [0] : vector<16x8xf32> to vector<8xf32>
    %3 = vector.shape_cast %2 : vector<8xf32> to vector<1x8xf32>
    %cst_3 = arith.constant 6.250000e-02 : f32
    %4 = vector.broadcast %cst_3 : f32 to vector<1x8xf32>
    %5 = arith.mulf %3, %4 : vector<1x8xf32>
    %6 = vector.broadcast %5 : vector<1x8xf32> to vector<16x8xf32>
    %7 = arith.subf %1, %6 : vector<16x8xf32>
    %8 = arith.mulf %7, %7 : vector<16x8xf32>
    %cst_4 = arith.constant dense<0.000000e+00> : vector<8xf32>
    %9 = vector.multi_reduction <add>, %8, %cst_4 [0] : vector<16x8xf32> to vector<8xf32>
    %10 = vector.shape_cast %9 : vector<8xf32> to vector<1x8xf32>
    %cst_5 = arith.constant 6.250000e-02 : f32
    %11 = vector.broadcast %cst_5 : f32 to vector<1x8xf32>
    %12 = arith.mulf %10, %11 : vector<1x8xf32>
    %13 = math.sqrt %12 : vector<1x8xf32>
    %cst_6 = arith.constant 9.99999974E-6 : f32
    %14 = vector.broadcast %cst_6 : f32 to vector<1x8xf32>
    %15 = arith.addf %13, %14 : vector<1x8xf32>
    %16 = tpu.reciprocal %15 : vector<1x8xf32> -> vector<1x8xf32>
    %c0_7 = arith.constant 0 : index
    %c0_8 = arith.constant 0 : index
    %c0_9 = arith.constant 0 : index
    %c0_10 = arith.constant 0 : index
    %17 = vector.load %arg4[%c0_7, %c0_8, %c0_9, %c0_10] : memref<1x1x16x1xf32, #tpu.memory_space<vmem>>, vector<1x1x16x1xf32>
    %18 = vector.shape_cast %17 : vector<1x1x16x1xf32> to vector<16x1xf32>
    %c0_11 = arith.constant 0 : index
    %c0_12 = arith.constant 0 : index
    %c0_13 = arith.constant 0 : index
    %c0_14 = arith.constant 0 : index
    %19 = vector.load %arg5[%c0_11, %c0_12, %c0_13, %c0_14] : memref<1x1x16x1xf32, #tpu.memory_space<vmem>>, vector<1x1x16x1xf32>
    %20 = vector.shape_cast %19 : vector<1x1x16x1xf32> to vector<16x1xf32>
    %21 = vector.broadcast %16 : vector<1x8xf32> to vector<16x8xf32>
    %22 = arith.mulf %7, %21 : vector<16x8xf32>
    %23 = vector.broadcast %18 : vector<16x1xf32> to vector<16x8xf32>
    %24 = arith.mulf %22, %23 : vector<16x8xf32>
    %25 = vector.broadcast %20 : vector<16x1xf32> to vector<16x8xf32>
    %26 = arith.addf %24, %25 : vector<16x8xf32>
    %c0_15 = arith.constant 0 : index
    %c0_16 = arith.constant 0 : index
    %c0_17 = arith.constant 0 : index
    %c0_18 = arith.constant 0 : index
    %27 = vector.load %arg6[%c0_15, %c0_16, %c0_17, %c0_18] : memref<1x1x16x8xf32, #tpu.memory_space<vmem>>, vector<1x1x16x8xf32>
    %28 = vector.shape_cast %27 : vector<1x1x16x8xf32> to vector<16x8xf32>
    %29 = vector.shape_cast %26 : vector<16x8xf32> to vector<1x1x16x8xf32>
    tpu.vector_store %arg6[%c0_15, %c0_16, %c0_17, %c0_18], %29 {strides = array<i32>} : memref<1x1x16x8xf32, #tpu.memory_space<vmem>>, vector<1x1x16x8xf32>,
    return
  }
  func.func @transform_0(%arg0: i32, %arg1: i32, %arg2: i32) -> (i32, i32, i32, i32) {
    %c0_i32 = arith.constant 0 : i32
    %c0_i32_0 = arith.constant 0 : i32
    return %arg1, %arg0, %c0_i32, %arg2 : i32, i32, i32, i32
  }
  func.func @transform_1(%arg0: i32, %arg1: i32, %arg2: i32) -> (i32, i32, i32, i32) {
    %c0_i32 = arith.constant 0 : i32
    %c0_i32_0 = arith.constant 0 : i32
    %c0_i32_1 = arith.constant 0 : i32
    %c0_i32_2 = arith.constant 0 : i32
    return %c0_i32, %arg0, %c0_i32_0, %c0_i32_1 : i32, i32, i32, i32
  }
  func.func @transform_2(%arg0: i32, %arg1: i32, %arg2: i32) -> (i32, i32, i32, i32) {
    %c0_i32 = arith.constant 0 : i32
    %c0_i32_0 = arith.constant 0 : i32
    %c0_i32_1 = arith.constant 0 : i32
    %c0_i32_2 = arith.constant 0 : i32
    return %c0_i32, %arg0, %c0_i32_0, %c0_i32_1 : i32, i32, i32, i32
  }
  func.func @transform_3(%arg0: i32, %arg1: i32, %arg2: i32) -> (i32, i32, i32, i32) {
    %c0_i32 = arith.constant 0 : i32
    %c0_i32_0 = arith.constant 0 : i32
    return %arg1, %arg0, %c0_i32, %arg2 : i32, i32, i32, i32
  }
}

</mosaic_0001>

<llo_original>
// kernel: tpu_custom_call.1
$region0: #{tpu_custom_call.1}
  #allocation0 [shape = 'u32[]', space=smem, size = 0x4, offset = 0x4, fixed_abs, tag = 'smem constant byte address 0x4 - core index']
  #allocation1 [shape = 'u32[72,128]{1,0:T(1,128)}', space=vmem, size = 0x9000, scoped, tag = 'internal scratch']
  %s0 = inlined_call_operand.vmem [shape: f32[2,2,16,8], index: 0, kind: input, shape index: {}]
  %s1 = inlined_call_operand.vmem [shape: f32[1,2,16,1], index: 1, kind: input, shape index: {}]
  %s2 = inlined_call_operand.vmem [shape: f32[1,2,16,1], index: 2, kind: input, shape index: {}]
  %s3 = inlined_call_operand.vmem [shape: f32[2,2,16,8], index: 3, kind: output, shape index: {}]
  %s4 = sld [smem:[#allocation0]]
  $region45: #{tpu_custom_call.1} parent=0
    _
  %s6 = ssub.s32 1, %s4
  %s7 = scalar_select 0, %s6, %s4
  loop: start=0, step=1, limit=6
  $region2: #{tpu_custom_call.1} parent=0 // loop_pre_header
    _
  $region3: #{tpu_custom_call.1} parent=0 // loop_header
    %s9 = sphi 0, %s13
    %p10 = scmp.ge.s32.totalorder %s9, 6
    %s16 = sphi 0, %s35
    %s17 = sphi 0, %s31
    %s18 = sphi 0, %s27
    %s19 = sphi 0, %s16
    %s20 = sphi 0, %s17
    %s21 = sphi 0, %s18
    %s22 = sphi 0, %s19
    %s23 = sphi 0, %s20
    %s24 = sphi 0, %s21
    %s42 = sphi 0, %s44
    %s45 = sphi 0, %s42
    %s46 = sphi 0, %s45
    %s62 = sphi 0, %s46
    %s68 = sphi 0, %s70
    %s71 = sphi 0, %s68
    %s72 = sphi 0, %s71
    %s88 = sphi 0, %s72
    %s94 = sphi 0, %s96
    %s97 = sphi 0, %s94
    %s98 = sphi 0, %s97
    %s114 = sphi 0, %s98
    %s124 = sphi 0, %s126
    %s127 = sphi 0, %s124
    %s128 = sphi 0, %s127
    %s144 = sphi 0, %s128
  $region4: #{tpu_custom_call.1} parent=0 // loop_header_branch
    %12 = sbr.rel (%p10) target = $region8
  $region5: #{tpu_custom_call.1} parent=0 // loop_body
    %s14 = ssub.s32 %s9, 1
    %s15 = ssub.s32 %s9, 2
    %s25 = sadd.s32 1, %s18
    %p26 = scmp.ge.s32.totalorder %s25, 1
    %s27 = scalar_select %p26, 0, %s25
    %s28 = sadd.s32 1, %s17
    %s29 = scalar_select %p26, %s28, %s17
    %p30 = scmp.ge.s32.totalorder %s29, 2
    %s31 = scalar_select %p30, 0, %s29
    %s32 = sadd.s32 1, %s16
    %s33 = scalar_select %p30, %s32, %s16
    %p34 = scmp.ge.s32.totalorder %s33, 2
    %s35 = scalar_select %p34, 0, %s33
    %s36 = ssub.s32 %s17, %s31
    %s37 = ssub.s32 %s16, %s35
    %s38 = sor.u32 %s36, %s37
    %s39 = ssub.s32 %s18, %s27
    %s40 = sor.u32 %s38, %s39
    %p41 = scmp.eq.s32.totalorder %s40, 0
    %s43 = sadd.s32 %s42, 1
    %s44 = scalar_select %p41, %s42, %s43
    %p47 = pneg %p41
    %p48 = scmp.eq.s32.totalorder %s9, 3
    %p49 = por %p47, %p48
    %p50 = scmp.ne.s32.totalorder %s42, %s45
    %p51 = scmp.eq.s32.totalorder %s9, 0
    %p52 = por %p50, %p51
    %p53 = scmp.ne.s32.totalorder %s42, %s45
    %p54 = scmp.eq.s32.totalorder %s14, 3
    %p55 = por %p53, %p54
    %p56 = scmp.ne.s32.totalorder %s45, %s46
    %p57 = scmp.eq.s32.totalorder %s14, 0
    %p58 = por %p56, %p57
    %p59 = scmp.ne.s32.totalorder %s45, %s46
    %p60 = scmp.eq.s32.totalorder %s15, 3
    %p61 = por %p59, %p60
    %p63 = scmp.ne.s32.totalorder %s46, %s62
    %p64 = scmp.eq.s32.totalorder %s15, 0
    %p65 = por %p63, %p64
    %s66 = ssub.s32 %s16, %s35
    %p67 = scmp.eq.s32.totalorder %s66, 0
    %s69 = sadd.s32 %s68, 1
    %s70 = scalar_select %p67, %s68, %s69
    %p73 = pneg %p67
    %p74 = scmp.eq.s32.totalorder %s9, 3
    %p75 = por %p73, %p74
    %p76 = scmp.ne.s32.totalorder %s68, %s71
    %p77 = scmp.eq.s32.totalorder %s9, 0
    %p78 = por %p76, %p77
    %p79 = scmp.ne.s32.totalorder %s68, %s71
    %p80 = scmp.eq.s32.totalorder %s14, 3
    %p81 = por %p79, %p80
    %p82 = scmp.ne.s32.totalorder %s71, %s72
    %p83 = scmp.eq.s32.totalorder %s14, 0
    %p84 = por %p82, %p83
    %p85 = scmp.ne.s32.totalorder %s71, %s72
    %p86 = scmp.eq.s32.totalorder %s15, 3
    %p87 = por %p85, %p86
    %p89 = scmp.ne.s32.totalorder %s72, %s88
    %p90 = scmp.eq.s32.totalorder %s15, 0
    %p91 = por %p89, %p90
    %s92 = ssub.s32 %s16, %s35
    %p93 = scmp.eq.s32.totalorder %s92, 0
    %s95 = sadd.s32 %s94, 1
    %s96 = scalar_select %p93, %s94, %s95
    %p99 = pneg %p93
    %p100 = scmp.eq.s32.totalorder %s9, 3
    %p101 = por %p99, %p100
    %p102 = scmp.ne.s32.totalorder %s94, %s97
    %p103 = scmp.eq.s32.totalorder %s9, 0
    %p104 = por %p102, %p103
    %p105 = scmp.ne.s32.totalorder %s94, %s97
    %p106 = scmp.eq.s32.totalorder %s14, 3
    %p107 = por %p105, %p106
    %p108 = scmp.ne.s32.totalorder %s97, %s98
    %p109 = scmp.eq.s32.totalorder %s14, 0
    %p110 = por %p108, %p109
    %p111 = scmp.ne.s32.totalorder %s97, %s98
    %p112 = scmp.eq.s32.totalorder %s15, 3
    %p113 = por %p111, %p112
    %p115 = scmp.ne.s32.totalorder %s98, %s114
    %p116 = scmp.eq.s32.totalorder %s15, 0
    %p117 = por %p115, %p116
    %s118 = ssub.s32 %s17, %s31
    %s119 = ssub.s32 %s16, %s35
    %s120 = sor.u32 %s118, %s119
    %s121 = ssub.s32 %s18, %s27
    %s122 = sor.u32 %s120, %s121
    %p123 = scmp.eq.s32.totalorder %s122, 0
    %s125 = sadd.s32 %s124, 1
    %s126 = scalar_select %p123, %s124, %s125
    %p129 = pneg %p123
    %p130 = scmp.eq.s32.totalorder %s9, 3
    %p131 = por %p129, %p130
    %p132 = scmp.ne.s32.totalorder %s124, %s127
    %p133 = scmp.eq.s32.totalorder %s9, 0
    %p134 = por %p132, %p133
    %p135 = scmp.ne.s32.totalorder %s124, %s127
    %p136 = scmp.eq.s32.totalorder %s14, 3
    %p137 = por %p135, %p136
    %p138 = scmp.ne.s32.totalorder %s127, %s128
    %p139 = scmp.eq.s32.totalorder %s14, 0
    %p140 = por %p138, %p139
    %p141 = scmp.ne.s32.totalorder %s127, %s128
    %p142 = scmp.eq.s32.totalorder %s15, 3
    %p143 = por %p141, %p142
    %p145 = scmp.ne.s32.totalorder %s128, %s144
    %p146 = scmp.eq.s32.totalorder %s15, 0
    %p147 = por %p145, %p146
    %p148 = scmp.le.s32.totalorder 1, %s9
    %p149 = scmp.lt.s32.totalorder %s9, 5
    %p150 = pnand %p148, %p149
    %p151 = pneg %p150
    // Predicated region
    $region9: #{tpu_custom_call.1} parent=5 // pred_check
      _
    $region10: #{tpu_custom_call.1} parent=5 // pred_check_branch
      %153 = sbr.rel (%p150) target = $region12
    $region11: #{tpu_custom_call.1} parent=5 // pred_region
      %s154 = ssub.s32 %s9, 1
    $region12: #{tpu_custom_call.1} parent=5 // pred_fallthru
      _
    %p155 = scmp.lt.s32.totalorder %s9, 4
    // Predicated region
    $region13: #{tpu_custom_call.1} parent=5 // pred_check
      %p156 = pneg %p155
    $region14: #{tpu_custom_call.1} parent=5 // pred_check_branch
      %158 = sbr.rel (%p156) target = $region16
    $region15: #{tpu_custom_call.1} parent=5 // pred_region
      // Predicated region
      $region17: #{tpu_custom_call.1} parent=15 // pred_check
        %p159 = pneg %p52
      $region18: #{tpu_custom_call.1} parent=15 // pred_check_branch
        %161 = sbr.rel (%p159) target = $region20
      $region19: #{tpu_custom_call.1} parent=15 // pred_region
        %p162 = scmp.lt.s32.totalorder %s17, 1
        %s163 = scalar_select %p162, %s17, 1
        %p164 = scmp.lt.s32.totalorder %s16, 1
        %s165 = scalar_select %p164, %s16, 1
        %p166 = scmp.lt.s32.totalorder %s18, 0
        %s167 = scalar_select %p166, %s18, 0
        %s168 = smul.addr %s165, 2
        %s169 = sadd.s32 %s167, %s168
        %s170 = smul.addr %s163, 4
        %s171 = sadd.s32 %s169, %s170
        %s172 = smul.addr %s171, 8
        %s173 = scalar_lea.vmem %s0, %s172
      $region20: #{tpu_custom_call.1} parent=15 // pred_fallthru
        _
      // Predicated region
      $region21: #{tpu_custom_call.1} parent=15 // pred_check
        %p174 = pneg %p78
      $region22: #{tpu_custom_call.1} parent=15 // pred_check_branch
        %176 = sbr.rel (%p174) target = $region24
      $region23: #{tpu_custom_call.1} parent=15 // pred_region
        %p177 = scmp.lt.s32.totalorder %s16, 1
        %s178 = scalar_select %p177, %s16, 1
        %s179 = smul.addr %s178, 2
        %s180 = smul.addr %s179, 8
        %s181 = scalar_lea.vmem %s1, %s180
      $region24: #{tpu_custom_call.1} parent=15 // pred_fallthru
        _
      // Predicated region
      $region25: #{tpu_custom_call.1} parent=15 // pred_check
        %p182 = pneg %p104
      $region26: #{tpu_custom_call.1} parent=15 // pred_check_branch
        %184 = sbr.rel (%p182) target = $region28
      $region27: #{tpu_custom_call.1} parent=15 // pred_region
        %p185 = scmp.lt.s32.totalorder %s16, 1
        %s186 = scalar_select %p185, %s16, 1
        %s187 = smul.addr %s186, 2
        %s188 = smul.addr %s187, 8
        %s189 = scalar_lea.vmem %s2, %s188
      $region28: #{tpu_custom_call.1} parent=15 // pred_fallthru
        _
    $region16: #{tpu_custom_call.1} parent=5 // pred_fallthru
      _
    %p190 = scmp.le.s32.totalorder 1, %s9
    %p191 = scmp.lt.s32.totalorder %s9, 5
    %p192 = pnand %p190, %p191
    %p193 = pneg %p192
    // Predicated region
    $region29: #{tpu_custom_call.1} parent=5 // pred_check
      _
    $region30: #{tpu_custom_call.1} parent=5 // pred_check_branch
      %195 = sbr.rel (%p192) target = $region32
    $region31: #{tpu_custom_call.1} parent=5 // pred_region
      %s196 = ssub.s32 %s9, 1
      %p197 = scmp.lt.s32.totalorder %s20, 1
      %s198 = scalar_select %p197, %s20, 1
      %p199 = scmp.lt.s32.totalorder %s19, 1
      %s200 = scalar_select %p199, %s19, 1
      %p201 = scmp.lt.s32.totalorder %s21, 0
      %s202 = scalar_select %p201, %s21, 0
      %s203 = smul.addr %s200, 2
      %s204 = sadd.s32 %s202, %s203
      %s205 = smul.addr %s198, 4
      %s206 = sadd.s32 %s204, %s205
      %s207 = smul.addr %s206, 8
      %s208 = scalar_lea.vmem %s0, %s207
      %p209 = pneg %p58
      %p210 = pneg %p55
      %p211 = scmp.lt.s32.totalorder %s19, 1
      %s212 = scalar_select %p211, %s19, 1
      %s213 = smul.addr %s212, 2
      %s214 = smul.addr %s213, 8
      %s215 = scalar_lea.vmem %s1, %s214
      %p216 = pneg %p84
      %p217 = pneg %p81
      %p218 = scmp.lt.s32.totalorder %s19, 1
      %s219 = scalar_select %p218, %s19, 1
      %s220 = smul.addr %s219, 2
      %s221 = smul.addr %s220, 8
      %s222 = scalar_lea.vmem %s2, %s221
      %p223 = pneg %p110
      %p224 = pneg %p107
      %p225 = pneg %p140
      %p226 = pneg %p137
      %p227 = scmp.lt.s32.totalorder %s20, 1
      %s228 = scalar_select %p227, %s20, 1
      %p229 = scmp.lt.s32.totalorder %s19, 1
      %s230 = scalar_select %p229, %s19, 1
      %p231 = scmp.lt.s32.totalorder %s21, 0
      %s232 = scalar_select %p231, %s21, 0
      %s233 = smul.addr %s230, 2
      %s234 = sadd.s32 %s232, %s233
      %s235 = smul.addr %s228, 4
      %s236 = sadd.s32 %s234, %s235
      %s237 = smul.addr %s236, 8
      %s238 = scalar_lea.vmem %s3, %s237
      %p239 = scmp.lt.s32.totalorder %s20, 1
      %s240 = scalar_select %p239, %s20, 1
      %p241 = scmp.lt.s32.totalorder %s19, 1
      %s242 = scalar_select %p241, %s19, 1
      %p243 = scmp.lt.s32.totalorder %s21, 0
      %s244 = scalar_select %p243, %s21, 0
      %s245 = smul.addr %s242, 2
      %s246 = sadd.s32 %s244, %s245
      %s247 = smul.addr %s240, 4
      %s248 = sadd.s32 %s246, %s247
      %s249 = smul.addr %s248, 8
      %s250 = scalar_lea.vmem %s0, %s249
      %p251 = scmp.lt.s32.totalorder %s19, 1
      %s252 = scalar_select %p251, %s19, 1
      %s253 = smul.addr %s252, 2
      %s254 = smul.addr %s253, 8
      %s255 = scalar_lea.vmem %s1, %s254
      %p256 = scmp.lt.s32.totalorder %s19, 1
      %s257 = scalar_select %p256, %s19, 1
      %s258 = smul.addr %s257, 2
      %s259 = smul.addr %s258, 8
      %s260 = scalar_lea.vmem %s2, %s259
      %p261 = scmp.lt.s32.totalorder %s20, 1
      %s262 = scalar_select %p261, %s20, 1
      %p263 = scmp.lt.s32.totalorder %s19, 1
      %s264 = scalar_select %p263, %s19, 1
      %p265 = scmp.lt.s32.totalorder %s21, 0
      %s266 = scalar_select %p265, %s21, 0
      %s267 = smul.addr %s264, 2
      %s268 = sadd.s32 %s266, %s267
      %s269 = smul.addr %s262, 4
      %s270 = sadd.s32 %s268, %s269
      %s271 = smul.addr %s270, 8
      %s272 = scalar_lea.vmem %s3, %s271
      %v273 = vld [vmem:[%s250] sm:$0xff]
      %v274 = vld [vmem:[%s250 + $0x8] sm:$0xff]
      %vm275 = vcmask 64512
      %v276 = vsel %vm275, %v273, 0.0
      %v277 = vsel %vm275, %v274, 0.0
      %v278 = vadd.f32 %v276, %v277
      %v279 = vrot.slane %v278, 4
      %v280 = vadd.f32 %v278, %v279
      %v281 = vrot.slane %v280, 2
      %v282 = vadd.f32 %v280, %v281
      %v283 = vrot.slane %v282, 1
      %v284 = vadd.f32 %v282, %v283
      %v285 = vmul.f32 %v284, 0.0625
      %v286 = vsub.f32 %v273, %v285
      %v287 = vsub.f32 %v274, %v285
      %v288 = vmul.f32 %v286, %v286
      %v289 = vmul.f32 %v287, %v287
      %v290 = vsel %vm275, %v288, 0.0
      %v291 = vsel %vm275, %v289, 0.0
      %v292 = vadd.f32 %v290, %v291
      %v293 = vrot.slane %v292, 4
      %v294 = vadd.f32 %v292, %v293
      %v295 = vrot.slane %v294, 2
      %v296 = vadd.f32 %v294, %v295
      %v297 = vrot.slane %v296, 1
      %v298 = vadd.f32 %v296, %v297
      %v299 = vmul.f32 %v298, 0.0625
      %v300 = vrsqrt.pop %v299
      %v301 = vmul.f32 %v300, %v299
      %v302 = vmul.f32 %v301, %v300
      %v303 = vmul.f32 0.5, %v302
      %v304 = vsub.f32 1.5, %v303
      %v305 = vmul.f32 %v300, %v304
      %v306 = vmul.f32 %v299, %v305
      %vm307 = vcmp.eq.f32.partialorder %v299, inf
      %v308 = vsel %vm307, %v299, %v306
      %vm309 = vcmp.eq.f32.partialorder %v299, 0.0
      %v310 = vand.u32 %v299, 2147483648
      %v311 = vsel %vm309, %v310, %v308
      %v312 = vadd.f32 %v311, 1e-05
      %v313 = vrcp.pop %v312
      %v314 = vmul.f32 %v312, %v313
      %v315 = vsub.f32 1.0, %v314
      %v316 = vmul.f32 %v313, %v315
      %v317 = vadd.f32 %v313, %v316
      %vm318 = vweird.f32 %v312
      %vm319 = vweird.f32 %v313
      %vm320 = vmor %vm318, %vm319
      %v321 = vsel %vm320, %v313, %v317
      %v322 = vand.u32 2147483647, %v312
      %vm323 = vcmp.eq.f32.partialorder %v322, 8.507059e+37
      %v324 = vand.u32 %v312, 2147483648
      %v325 = vor.u32 1.1754944e-38, %v324
      %v326 = vsel %vm323, %v325, %v321
      %v327 = vld [vmem:[%s255] sm:$0xff]
      %v328 = vld [vmem:[%s255 + $0x8] sm:$0xff]
      %v329 = vld [vmem:[%s260] sm:$0xff]
      %v330 = vld [vmem:[%s260 + $0x8] sm:$0xff]
      %v331 = vmul.f32 %v286, %v326
      %v332 = vmul.f32 %v287, %v326
      %334 = vset.pattern.permute.xlu0 0
      %335 = vperm.xlu0 %334, %v327
      %v336 = vpop.permute.xlu0 %335
      %339 = vset.pattern.permute.xlu0 0
      %340 = vperm.xlu0 %339, %v328
      %v341 = vpop.permute.xlu0 %340
      %v343 = vmul.f32 %v331, %v336
      %v344 = vmul.f32 %v332, %v341
      %346 = vset.pattern.permute.xlu0 0
      %347 = vperm.xlu0 %346, %v329
      %v348 = vpop.permute.xlu0 %347
      %351 = vset.pattern.permute.xlu0 0
      %352 = vperm.xlu0 %351, %v330
      %v353 = vpop.permute.xlu0 %352
      %v355 = vadd.f32 %v343, %v348
      %v356 = vadd.f32 %v344, %v353
      %357 = vst.msk [vmem:[%s272] sm:$0xff] %vm275, %v355
      %358 = vst.msk [vmem:[%s272 + $0x8] sm:$0xff] %vm275, %v356
      %p359 = scmp.lt.s32.totalorder %s20, 1
      %s360 = scalar_select %p359, %s20, 1
      %p361 = scmp.lt.s32.totalorder %s19, 1
      %s362 = scalar_select %p361, %s19, 1
      %p363 = scmp.lt.s32.totalorder %s21, 0
      %s364 = scalar_select %p363, %s21, 0
      %s365 = smul.addr %s362, 2
      %s366 = sadd.s32 %s364, %s365
      %s367 = smul.addr %s360, 4
      %s368 = sadd.s32 %s366, %s367
      %s369 = smul.addr %s368, 8
      %s370 = scalar_lea.vmem %s3, %s369
      // Predicated region
      $region33: #{tpu_custom_call.1} parent=31 // pred_check
        %p371 = pneg %p137
      $region34: #{tpu_custom_call.1} parent=31 // pred_check_branch
        %373 = sbr.rel (%p371) target = $region36
      $region35: #{tpu_custom_call.1} parent=31 // pred_region
        _
      $region36: #{tpu_custom_call.1} parent=31 // pred_fallthru
        _
    $region32: #{tpu_custom_call.1} parent=5 // pred_fallthru
      _
    %p374 = scmp.le.s32.totalorder 2, %s9
    // Predicated region
    $region37: #{tpu_custom_call.1} parent=5 // pred_check
      %p375 = pneg %p374
    $region38: #{tpu_custom_call.1} parent=5 // pred_check_branch
      %377 = sbr.rel (%p375) target = $region40
    $region39: #{tpu_custom_call.1} parent=5 // pred_region
      %s378 = ssub.s32 %s9, 2
      // Predicated region
      $region41: #{tpu_custom_call.1} parent=39 // pred_check
        %p379 = pneg %p143
      $region42: #{tpu_custom_call.1} parent=39 // pred_check_branch
        %381 = sbr.rel (%p379) target = $region44
      $region43: #{tpu_custom_call.1} parent=39 // pred_region
        %p382 = scmp.lt.s32.totalorder %s23, 1
        %s383 = scalar_select %p382, %s23, 1
        %p384 = scmp.lt.s32.totalorder %s22, 1
        %s385 = scalar_select %p384, %s22, 1
        %p386 = scmp.lt.s32.totalorder %s24, 0
        %s387 = scalar_select %p386, %s24, 0
        %s388 = smul.addr %s385, 2
        %s389 = sadd.s32 %s387, %s388
        %s390 = smul.addr %s383, 4
        %s391 = sadd.s32 %s389, %s390
        %s392 = smul.addr %s391, 8
        %s393 = scalar_lea.vmem %s3, %s392
      $region44: #{tpu_custom_call.1} parent=39 // pred_fallthru
        _
    $region40: #{tpu_custom_call.1} parent=5 // pred_fallthru
      _
  $region6: #{tpu_custom_call.1} parent=0 // loop_footer
    %s13 = sadd.s32 1, %s9
  $region7: #{tpu_custom_call.1} parent=0 // loop_footer_branch
    %8 = sbr.rel target = $region3
  $region8: #{tpu_custom_call.1} parent=0 // loop_exit
    _

</llo_original>
